<compile_context>
chip_gen: v6e
topology: v6e:2x2x1
jax: 0.10.0
libtpu: 0.0.40
codegen_flags: <defaults>
</compile_context>

<pallas_src>
import functools

import jax
import jax.numpy as jnp
from jax.experimental import pallas as pl
from jax.experimental.pallas import tpu as pltpu

TEMPERATURE = 0.07
COS_EPS = 1e-8          # torch.nn.CosineSimilarity default eps
_NEG = -1e30            # finite "-inf" for pad masking (exp() -> 0, no NaNs)


def _round_up(x, m):
    return ((x + m - 1) // m) * m


def _contrastive_loss_kernel(img_ref, txt_t_ref, inv_i_ref, inv_t_ref,
                             row_out_ref, col_part_ref,
                             row_s_ref, diag_s_ref, *,
                             temperature, b_valid, b_pad, block):
    i = pl.program_id(0)           # row (image) block -- megacore-parallel
    j = pl.program_id(1)           # column (text) block -- reduction sweep
    nj = pl.num_programs(1)
    T = block
    scale = 1.0 / temperature      # |logits| <= scale: static LSE shift
    need_mask = b_pad != b_valid   # static Python bool

    # (T, D) x (D, T) pairwise dots straight on the MXU (text pre-transposed
    # in HBM, so no per-tile transpose; operands stay in their input dtype).
    dots = jnp.dot(img_ref[...], txt_t_ref[...],
                   preferred_element_type=jnp.float32)           # (T, T)

    # Hoisted inverse norms: (T,1) image side (1/temperature folded in) and
    # lane-major (1,T) text side -> two broadcast multiplies, no transpose.
    z = dots * inv_i_ref[...] * inv_t_ref[...]                   # (T, T)

    row_valid = None
    if need_mask:
        row_ids = i * T + jax.lax.broadcasted_iota(jnp.int32, (T, 1), 0)
        col_ids = j * T + jax.lax.broadcasted_iota(jnp.int32, (1, T), 1)
        row_valid = row_ids < b_valid
        col_valid = col_ids < b_valid
        z = jnp.where(jnp.logical_and(row_valid, col_valid), z, _NEG)

    # ONE exp pass feeds both logsumexp directions.
    e = jnp.exp(z - scale)                                       # (T, T)

    # ---- image->text: per-row exp sums accumulated across the j sweep -----
    @pl.when(j == 0)
    def _():
        row_s_ref[...] = jnp.zeros_like(row_s_ref)
        diag_s_ref[...] = jnp.zeros_like(diag_s_ref)

    row_s_ref[...] += jnp.sum(e, axis=-1, keepdims=True)

    # ---- text->image: per-(row-block, column) partial sums as an output ---
    # (reduced over i by the wrapper epilogue; keeps grid axis i "parallel").
    col_part_ref[0] = jnp.sum(e, axis=0, keepdims=True)

    # ---- diagonal (matching-pair) logits, recovered from z on i == j ------
    @pl.when(i == j)
    def _():
        rr = jax.lax.broadcasted_iota(jnp.int32, (T, T), 0)
        cc = jax.lax.broadcasted_iota(jnp.int32, (T, T), 1)
        dmask = rr == cc
        if need_mask:
            dmask = jnp.logical_and(dmask, row_valid)   # drop padded diagonal
        diag_s_ref[...] = jnp.sum(jnp.where(dmask, z, 0.0), axis=-1,
                                  keepdims=True)

    # ---- finalize this row block once its last column block has been seen -
    @pl.when(j == nj - 1)
    def _():
        contrib = (scale + jnp.log(row_s_ref[...])) - 2.0 * diag_s_ref[...]
        if need_mask:
            contrib = jnp.where(row_valid, contrib, 0.0)
        row_out_ref[...] = contrib


def contrastive_loss(image_features, text_features,
                     temperature=TEMPERATURE, block_size=None, mxu_dtype=None):
    assert image_features.shape == text_features.shape
    B, D = image_features.shape
    D_pad = _round_up(D, 128)

    # Tile size: 512 sits at the MXU roofline on v7x and is a solid default
    # elsewhere; on v6e with bf16 inputs pass block_size=768/1024 for more.
    T = block_size if block_size is not None else min(512, _round_up(B, 8))
    assert T % 8 == 0
    B_pad = _round_up(B, T)
    nb = B_pad // T
    if nb > 1:
        assert T % 128 == 0, "multi-block tiles must be lane-aligned (128)"

    scale = 1.0 / float(temperature)
    eps2 = COS_EPS * COS_EPS

    # Hoisted per-row scales (f32), computed once from the unpadded features:
    # 1/temperature is folded into the image side; the text side is produced
    # lane-major (1, B) so the kernel never transposes it.
    img_f = image_features.astype(jnp.float32)
    txt_f = text_features.astype(jnp.float32)
    inv_img = scale * jax.lax.rsqrt(
        jnp.maximum(jnp.sum(img_f * img_f, axis=-1, keepdims=True), eps2))
    inv_txt = jax.lax.rsqrt(
        jnp.maximum(jnp.sum(txt_f * txt_f, axis=-1, keepdims=True), eps2)).T

    pad_b, pad_d = B_pad - B, D_pad - D
    img, txt = image_features, text_features
    if mxu_dtype is not None:        # e.g. jnp.bfloat16 on v5e for f32 inputs
        img, txt = img.astype(mxu_dtype), txt.astype(mxu_dtype)
    if pad_b or pad_d:
        img = jnp.pad(img, ((0, pad_b), (0, pad_d)))
        txt = jnp.pad(txt, ((0, pad_b), (0, pad_d)))
        inv_img = jnp.pad(inv_img, ((0, pad_b), (0, 0)))
        inv_txt = jnp.pad(inv_txt, ((0, 0), (0, pad_b)))
    # One-time HBM transpose so the MXU consumes (D_pad, T) text tiles with
    # the canonical contraction (no hidden per-tile vxpose).
    txt_t = txt.T

    kernel = functools.partial(
        _contrastive_loss_kernel,
        temperature=float(temperature), b_valid=B, b_pad=B_pad, block=T)

    itemsize = jnp.dtype(img.dtype).itemsize
    # Per-step VMEM footprint: double-buffered feature tiles + (T,T) f32
    # intermediates; raise the scoped limit accordingly (capped for v7x).
    est = (4 * T * D_pad * itemsize      # img + txt_t tiles, x2 buffers
           + 4 * T * T * 4               # dots / z / e / temporaries
           + 16 * T * 4 + 4096)          # inv / row / col / diag blocks
    vmem_limit = int(min(64 * 2**20, max(32 * 2**20, 2 * est)))

    grid_spec = pltpu.PrefetchScalarGridSpec(
        num_scalar_prefetch=0,
        grid=(nb, nb),
        in_specs=[
            pl.BlockSpec((T, D_pad), lambda i, j: (i, 0)),    # image rows
            pl.BlockSpec((D_pad, T), lambda i, j: (0, j)),    # text cols (pre-T)
            pl.BlockSpec((T, 1), lambda i, j: (i, 0)),        # image inv norms
            pl.BlockSpec((1, T), lambda i, j: (0, j)),        # text inv norms
        ],
        out_specs=[
            pl.BlockSpec((T, 1), lambda i, j: (i, 0)),        # lse_row - 2*diag
            pl.BlockSpec((1, 1, T), lambda i, j: (i, 0, j)),  # col partial sums
        ],
        scratch_shapes=[
            pltpu.VMEM((T, 1), jnp.float32),   # row (i2t) exp-sum accumulator
            pltpu.VMEM((T, 1), jnp.float32),   # diagonal-logit accumulator
        ],
    )

    cost = pl.CostEstimate(
        flops=2 * B_pad * B_pad * D_pad,
        transcendentals=B_pad * B_pad,
        bytes_accessed=(1 + nb) * B_pad * D_pad * itemsize
                       + (nb + 2) * B_pad * 4)

    row_out, col_part = pl.pallas_call(
        kernel,
        out_shape=(jax.ShapeDtypeStruct((B_pad, 1), jnp.float32),
                   jax.ShapeDtypeStruct((nb, 1, B_pad), jnp.float32)),
        grid_spec=grid_spec,
        # Row axis is independent (megacore-parallel on v7x); the column axis
        # carries the row-wise reduction -> "arbitrary".
        compiler_params=pltpu.CompilerParams(
            dimension_semantics=("parallel", "arbitrary"),
            vmem_limit_bytes=vmem_limit),
        cost_estimate=cost,
    )(img, txt_t, inv_img, inv_txt)

    # Tiny XLA epilogue: finish the text->image logsumexp across row blocks
    # and reduce everything to the scalar mean.
    col_s = jnp.sum(col_part[:, 0, :], axis=0)[:B]        # (B,)
    lse_col = scale + jnp.log(col_s)
    total = jnp.sum(row_out) + jnp.sum(lse_col)
    return total / (2.0 * B)


def _reference_loss(image_features, text_features, temperature=TEMPERATURE):
    """Plain-JAX reference mirroring the PyTorch module."""
    img = image_features.astype(jnp.float32)
    txt = text_features.astype(jnp.float32)
    dots = img @ txt.T
    ni = jnp.linalg.norm(img, axis=-1, keepdims=True)
    nt = jnp.linalg.norm(txt, axis=-1, keepdims=True)
    logits = dots / jnp.maximum(ni * nt.T, COS_EPS) / temperature
    labels = jnp.arange(logits.shape[0])

    def ce(lg):
        lse = jax.scipy.special.logsumexp(lg, axis=-1)
        tgt = lg[jnp.arange(lg.shape[0]), labels]
        return jnp.mean(lse - tgt)

    return (ce(logits) + ce(logits.T)) / 2.0


if __name__ == "__main__":
    key = jax.random.PRNGKey(0)
    k1, k2 = jax.random.split(key)
    B, D = 8, 32
    image_features = jax.random.normal(k1, (B, D), dtype=jnp.float32)
    text_features = jax.random.normal(k2, (B, D), dtype=jnp.float32)

    loss = contrastive_loss(image_features, text_features)
    jax.block_until_ready(loss)

    ref = _reference_loss(image_features, text_features)
    assert jnp.allclose(loss, ref, atol=1e-4, rtol=1e-4), (loss, ref)

    print("KERNEL_OK")
</pallas_src>

<mosaic_0001>
module attributes {stable_mosaic.version = 11 : i64} {
  func.func @_contrastive_loss_kernel(%arg0: i32, %arg1: i32, %arg2: memref<8x128xf32, #tpu.memory_space<vmem>>, %arg3: memref<128x8xf32, #tpu.memory_space<vmem>>, %arg4: memref<8x1xf32, #tpu.memory_space<vmem>>, %arg5: memref<1x8xf32, #tpu.memory_space<vmem>>, %arg6: memref<8x1xf32, #tpu.memory_space<vmem>>, %arg7: memref<1x1x8xf32, #tpu.memory_space<vmem>>, %arg8: memref<8x1xf32, #tpu.memory_space<vmem>>, %arg9: memref<8x1xf32, #tpu.memory_space<vmem>>) attributes {dimension_semantics = [#tpu.dimension_semantics<parallel>, #tpu.dimension_semantics<arbitrary>], iteration_bounds = array<i64: 1, 1>, scalar_prefetch = 0 : i64, scratch_operands = 2 : i64, tpu.core_type = #tpu.core_type<tc>, window_params = [{transform_indices = @transform_0, window_bounds = array<i64: 8, 128>}, {transform_indices = @transform_1, window_bounds = array<i64: 128, 8>}, {transform_indices = @transform_2, window_bounds = array<i64: 8, 1>}, {transform_indices = @transform_3, window_bounds = array<i64: 1, 8>}, {transform_indices = @transform_4, window_bounds = array<i64: 8, 1>}, {transform_indices = @transform_5, window_bounds = array<i64: 1, 1, 8>}]} {
    %c0 = arith.constant 0 : index
    %c0_0 = arith.constant 0 : index
    %0 = vector.load %arg2[%c0, %c0_0] : memref<8x128xf32, #tpu.memory_space<vmem>>, vector<8x128xf32>
    %c0_1 = arith.constant 0 : index
    %c0_2 = arith.constant 0 : index
    %1 = vector.load %arg3[%c0_1, %c0_2] : memref<128x8xf32, #tpu.memory_space<vmem>>, vector<128x8xf32>
    %cst = arith.constant dense<0.000000e+00> : vector<8x8xf32>
    %2 = tpu.matmul %0, %1, %cst {dimension_numbers = #tpu.dot_dimension_numbers<[1], [0], [0], [1], [0, 0, 1, 1], [], []>} : vector<8x128xf32>, vector<128x8xf32>, vector<8x8xf32> -> vector<8x8xf32>
    %c0_3 = arith.constant 0 : index
    %c0_4 = arith.constant 0 : index
    %3 = vector.load %arg4[%c0_3, %c0_4] : memref<8x1xf32, #tpu.memory_space<vmem>>, vector<8x1xf32>
    %4 = vector.broadcast %3 : vector<8x1xf32> to vector<8x8xf32>
    %5 = arith.mulf %2, %4 : vector<8x8xf32>
    %c0_5 = arith.constant 0 : index
    %c0_6 = arith.constant 0 : index
    %6 = vector.load %arg5[%c0_5, %c0_6] : memref<1x8xf32, #tpu.memory_space<vmem>>, vector<1x8xf32>
    %7 = vector.broadcast %6 : vector<1x8xf32> to vector<8x8xf32>
    %8 = arith.mulf %5, %7 : vector<8x8xf32>
    %cst_7 = arith.constant 14.2857141 : f32
    %9 = vector.broadcast %cst_7 : f32 to vector<8x8xf32>
    %10 = arith.subf %8, %9 : vector<8x8xf32>
    %11 = math.exp %10 : vector<8x8xf32>
    %c0_i32 = arith.constant 0 : i32
    %12 = arith.cmpi eq, %arg1, %c0_i32 : i32
    %13 = arith.extui %12 : i1 to i32
    %c0_i32_8 = arith.constant 0 : i32
    %14 = arith.cmpi ne, %13, %c0_i32_8 : i32
    scf.if %14 {
      %cst_21 = arith.constant 0.000000e+00 : f32
      %31 = vector.broadcast %cst_21 : f32 to vector<8x1xf32>
      %c0_22 = arith.constant 0 : index
      %c0_23 = arith.constant 0 : index
      %32 = vector.load %arg8[%c0_22, %c0_23] : memref<8x1xf32, #tpu.memory_space<vmem>>, vector<8x1xf32>
      tpu.vector_store %arg8[%c0_22, %c0_23], %31 {strides = array<i32>} : memref<8x1xf32, #tpu.memory_space<vmem>>, vector<8x1xf32>,
      %cst_24 = arith.constant 0.000000e+00 : f32
      %33 = vector.broadcast %cst_24 : f32 to vector<8x1xf32>
      %c0_25 = arith.constant 0 : index
      %c0_26 = arith.constant 0 : index
      %34 = vector.load %arg9[%c0_25, %c0_26] : memref<8x1xf32, #tpu.memory_space<vmem>>, vector<8x1xf32>
      tpu.vector_store %arg9[%c0_25, %c0_26], %33 {strides = array<i32>} : memref<8x1xf32, #tpu.memory_space<vmem>>, vector<8x1xf32>,
    } else {
    }
    %c0_9 = arith.constant 0 : index
    %c0_10 = arith.constant 0 : index
    %15 = vector.load %arg8[%c0_9, %c0_10] : memref<8x1xf32, #tpu.memory_space<vmem>>, vector<8x1xf32>
    %cst_11 = arith.constant dense<0.000000e+00> : vector<8xf32>
    %16 = vector.multi_reduction <add>, %11, %cst_11 [1] : vector<8x8xf32> to vector<8xf32>
    %17 = vector.shape_cast %16 : vector<8xf32> to vector<8x1xf32>
    %18 = arith.addf %15, %17 : vector<8x1xf32>
    %c0_12 = arith.constant 0 : index
    %c0_13 = arith.constant 0 : index
    %19 = vector.load %arg8[%c0_12, %c0_13] : memref<8x1xf32, #tpu.memory_space<vmem>>, vector<8x1xf32>
    tpu.vector_store %arg8[%c0_12, %c0_13], %18 {strides = array<i32>} : memref<8x1xf32, #tpu.memory_space<vmem>>, vector<8x1xf32>,
    %cst_14 = arith.constant dense<0.000000e+00> : vector<8xf32>
    %20 = vector.multi_reduction <add>, %11, %cst_14 [0] : vector<8x8xf32> to vector<8xf32>
    %21 = vector.shape_cast %20 : vector<8xf32> to vector<1x8xf32>
    %c0_15 = arith.constant 0 : index
    %c0_16 = arith.constant 0 : index
    %c0_17 = arith.constant 0 : index
    %22 = vector.load %arg7[%c0_15, %c0_16, %c0_17] : memref<1x1x8xf32, #tpu.memory_space<vmem>>, vector<1x1x8xf32>
    %23 = vector.shape_cast %22 : vector<1x1x8xf32> to vector<1x8xf32>
    %24 = vector.shape_cast %21 : vector<1x8xf32> to vector<1x1x8xf32>
    tpu.vector_store %arg7[%c0_15, %c0_16, %c0_17], %24 {strides = array<i32>} : memref<1x1x8xf32, #tpu.memory_space<vmem>>, vector<1x1x8xf32>,
    %25 = arith.cmpi eq, %arg0, %arg1 : i32
    %26 = arith.extui %25 : i1 to i32
    %c0_i32_18 = arith.constant 0 : i32
    %27 = arith.cmpi ne, %26, %c0_i32_18 : i32
    scf.if %27 {
      %31 = tpu.iota {dimensions = array<i32: 0>} : vector<8x8xi32>
      %32 = tpu.iota {dimensions = array<i32: 1>} : vector<8x8xi32>
      %33 = arith.cmpi eq, %31, %32 : vector<8x8xi32>
      %cst_21 = arith.constant 0.000000e+00 : f32
      %34 = vector.broadcast %cst_21 : f32 to vector<8x8xf32>
      %35 = arith.select %33, %8, %34 : vector<8x8xi1>, vector<8x8xf32>
      %cst_22 = arith.constant dense<0.000000e+00> : vector<8xf32>
      %36 = vector.multi_reduction <add>, %35, %cst_22 [1] : vector<8x8xf32> to vector<8xf32>
      %37 = vector.shape_cast %36 : vector<8xf32> to vector<8x1xf32>
      %c0_23 = arith.constant 0 : index
      %c0_24 = arith.constant 0 : index
      %38 = vector.load %arg9[%c0_23, %c0_24] : memref<8x1xf32, #tpu.memory_space<vmem>>, vector<8x1xf32>
      tpu.vector_store %arg9[%c0_23, %c0_24], %37 {strides = array<i32>} : memref<8x1xf32, #tpu.memory_space<vmem>>, vector<8x1xf32>,
    } else {
    }
    %c0_i32_19 = arith.constant 0 : i32
    %28 = arith.cmpi eq, %arg1, %c0_i32_19 : i32
    %29 = arith.extui %28 : i1 to i32
    %c0_i32_20 = arith.constant 0 : i32
    %30 = arith.cmpi ne, %29, %c0_i32_20 : i32
    scf.if %30 {
      %c0_21 = arith.constant 0 : index
      %c0_22 = arith.constant 0 : index
      %31 = vector.load %arg8[%c0_21, %c0_22] : memref<8x1xf32, #tpu.memory_space<vmem>>, vector<8x1xf32>
      %32 = math.log %31 : vector<8x1xf32>
      %cst_23 = arith.constant 14.2857141 : f32
      %33 = vector.broadcast %cst_23 : f32 to vector<8x1xf32>
      %34 = arith.addf %33, %32 : vector<8x1xf32>
      %c0_24 = arith.constant 0 : index
      %c0_25 = arith.constant 0 : index
      %35 = vector.load %arg9[%c0_24, %c0_25] : memref<8x1xf32, #tpu.memory_space<vmem>>, vector<8x1xf32>
      %cst_26 = arith.constant 2.000000e+00 : f32
      %36 = vector.broadcast %cst_26 : f32 to vector<8x1xf32>
      %37 = arith.mulf %36, %35 : vector<8x1xf32>
      %38 = arith.subf %34, %37 : vector<8x1xf32>
      %c0_27 = arith.constant 0 : index
      %c0_28 = arith.constant 0 : index
      %39 = vector.load %arg6[%c0_27, %c0_28] : memref<8x1xf32, #tpu.memory_space<vmem>>, vector<8x1xf32>
      tpu.vector_store %arg6[%c0_27, %c0_28], %38 {strides = array<i32>} : memref<8x1xf32, #tpu.memory_space<vmem>>, vector<8x1xf32>,
    } else {
    }
    return
  }
  func.func @transform_0(%arg0: i32, %arg1: i32) -> (i32, i32) {
    %c0_i32 = arith.constant 0 : i32
    %c0_i32_0 = arith.constant 0 : i32
    return %arg0, %c0_i32 : i32, i32
  }
  func.func @transform_1(%arg0: i32, %arg1: i32) -> (i32, i32) {
    %c0_i32 = arith.constant 0 : i32
    %c0_i32_0 = arith.constant 0 : i32
    return %c0_i32, %arg1 : i32, i32
  }
  func.func @transform_2(%arg0: i32, %arg1: i32) -> (i32, i32) {
    %c0_i32 = arith.constant 0 : i32
    %c0_i32_0 = arith.constant 0 : i32
    return %arg0, %c0_i32 : i32, i32
  }
  func.func @transform_3(%arg0: i32, %arg1: i32) -> (i32, i32) {
    %c0_i32 = arith.constant 0 : i32
    %c0_i32_0 = arith.constant 0 : i32
    return %c0_i32, %arg1 : i32, i32
  }
  func.func @transform_4(%arg0: i32, %arg1: i32) -> (i32, i32) {
    %c0_i32 = arith.constant 0 : i32
    %c0_i32_0 = arith.constant 0 : i32
    return %arg0, %c0_i32 : i32, i32
  }
  func.func @transform_5(%arg0: i32, %arg1: i32) -> (i32, i32, i32) {
    %c0_i32 = arith.constant 0 : i32
    %c0_i32_0 = arith.constant 0 : i32
    return %arg0, %c0_i32, %arg1 : i32, i32, i32
  }
}

</mosaic_0001>

<llo_original>
// kernel: tpu_custom_call.1
$region0: #{tpu_custom_call.1}
  #allocation0 [shape = 'u32[]', space=smem, size = 0x4, offset = 0x4, fixed_abs, tag = 'smem constant byte address 0x4 - core index']
  #allocation1 [shape = 'u32[144,128]{1,0:T(1,128)}', space=vmem, size = 0x12000, scoped, tag = 'internal scratch']
  #allocation2 [shape = 'f32[8,1]{1,0:T(8,128)}', space=vmem, size = 0x1000, scoped, tag = 'scratch operand']
  #allocation3 [shape = 'f32[8,1]{1,0:T(8,128)}', space=vmem, size = 0x1000, scoped, tag = 'scratch operand']
  %s0 = inlined_call_operand.vmem [shape: f32[8,128], index: 0, kind: input, shape index: {}]
  %s1 = inlined_call_operand.vmem [shape: f32[128,8], index: 1, kind: input, shape index: {}]
  %s2 = inlined_call_operand.vmem [shape: f32[8,1], index: 2, kind: input, shape index: {}]
  %s3 = inlined_call_operand.vmem [shape: f32[1,8], index: 3, kind: input, shape index: {}]
  %s4 = inlined_call_operand.vmem [shape: f32[8,1], index: 4, kind: output, shape index: {0}]
  %s5 = inlined_call_operand.hbm [shape: f32[1,1,8], index: 5, kind: output, shape index: {1}]
  %6 = xla_tuple %s4, %s5
  %s7 = sld [smem:[#allocation0]]
  $region46: #{tpu_custom_call.1} parent=0
    _
  %s9 = ssub.s32 1, %s7
  %s10 = scalar_select 0, %s9, %s7
  $region1: #{tpu_custom_call.1} parent=0
    #allocation4 [shape = 'u8[512]{0}', space=vmem, size = 0x400, scoped, tag = 'output window, operand 1, single buffered']
    #allocation5 [shape = 's32[1]{0}', space=sflag, size = 0x4, scoped, tag = 'scoped memory for tpu_custom_call.1']
    %11 = vsyncpa [#allocation5], 0
    // Predicated region
    $region2: #{tpu_custom_call.1} parent=1 // pred_check
      _
    $region3: #{tpu_custom_call.1} parent=1 // pred_check_branch
      %13 = sbr.rel (0) target = $region5
    $region4: #{tpu_custom_call.1} parent=1 // pred_region
      _
    $region5: #{tpu_custom_call.1} parent=1 // pred_fallthru
      _
    // Predicated region
    $region6: #{tpu_custom_call.1} parent=1 // pred_check
      _
    $region7: #{tpu_custom_call.1} parent=1 // pred_check_branch
      %15 = sbr.rel (0) target = $region9
    $region8: #{tpu_custom_call.1} parent=1 // pred_region
      _
    $region9: #{tpu_custom_call.1} parent=1 // pred_fallthru
      _
    // Predicated region
    $region10: #{tpu_custom_call.1} parent=1 // pred_check
      _
    $region11: #{tpu_custom_call.1} parent=1 // pred_check_branch
      %17 = sbr.rel (0) target = $region13
    $region12: #{tpu_custom_call.1} parent=1 // pred_region
      _
    $region13: #{tpu_custom_call.1} parent=1 // pred_fallthru
      _
    // Predicated region
    $region14: #{tpu_custom_call.1} parent=1 // pred_check
      _
    $region15: #{tpu_custom_call.1} parent=1 // pred_check_branch
      %19 = sbr.rel (0) target = $region17
    $region16: #{tpu_custom_call.1} parent=1 // pred_region
      _
    $region17: #{tpu_custom_call.1} parent=1 // pred_fallthru
      _
    %v20 = vld [vmem:[%s0] sm:$0xff]
    %v21 = vld [vmem:[%s1] sm:$0xff]
    %v22 = vld [vmem:[%s1 + $0x8] sm:$0xff]
    %v23 = vld [vmem:[%s1 + $0x10] sm:$0xff]
    %v24 = vld [vmem:[%s1 + $0x18] sm:$0xff]
    %v25 = vld [vmem:[%s1 + $0x20] sm:$0xff]
    %v26 = vld [vmem:[%s1 + $0x28] sm:$0xff]
    %v27 = vld [vmem:[%s1 + $0x30] sm:$0xff]
    %v28 = vld [vmem:[%s1 + $0x38] sm:$0xff]
    %v29 = vld [vmem:[%s1 + $0x40] sm:$0xff]
    %v30 = vld [vmem:[%s1 + $0x48] sm:$0xff]
    %v31 = vld [vmem:[%s1 + $0x50] sm:$0xff]
    %v32 = vld [vmem:[%s1 + $0x58] sm:$0xff]
    %v33 = vld [vmem:[%s1 + $0x60] sm:$0xff]
    %v34 = vld [vmem:[%s1 + $0x68] sm:$0xff]
    %v35 = vld [vmem:[%s1 + $0x70] sm:$0xff]
    %v36 = vld [vmem:[%s1 + $0x78] sm:$0xff]
    %37 = vmatprep.subr.mxu0 0.0
    %38 = vmatpush1.msra.mxu0 %v36
    %39 = vmatprep.subr.mxu0 0.0
    %40 = vmatpush1.msra.mxu0 %v35
    %41 = vmatprep.subr.mxu0 0.0
    %42 = vmatpush1.msra.mxu0 %v34
    %43 = vmatprep.subr.mxu0 0.0
    %44 = vmatpush1.msra.mxu0 %v33
    %45 = vmatprep.subr.mxu0 0.0
    %46 = vmatpush1.msra.mxu0 %v32
    %47 = vmatprep.subr.mxu0 0.0
    %48 = vmatpush1.msra.mxu0 %v31
    %49 = vmatprep.subr.mxu0 0.0
    %50 = vmatpush1.msra.mxu0 %v30
    %51 = vmatprep.subr.mxu0 0.0
    %52 = vmatpush1.msra.mxu0 %v29
    %53 = vmatprep.subr.mxu0 0.0
    %54 = vmatpush1.msra.mxu0 %v28
    %55 = vmatprep.subr.mxu0 0.0
    %56 = vmatpush1.msra.mxu0 %v27
    %57 = vmatprep.subr.mxu0 0.0
    %58 = vmatpush1.msra.mxu0 %v26
    %59 = vmatprep.subr.mxu0 0.0
    %60 = vmatpush1.msra.mxu0 %v25
    %61 = vmatprep.subr.mxu0 0.0
    %62 = vmatpush1.msra.mxu0 %v24
    %63 = vmatprep.subr.mxu0 0.0
    %64 = vmatpush1.msra.mxu0 %v23
    %65 = vmatprep.subr.mxu0 0.0
    %66 = vmatpush1.msra.mxu0 %v22
    %67 = vmatprep.subr.mxu0 0.0
    %68 = vmatpush1.msra.mxu0 %v21
    %69 = vmatprep.subr.mxu0 0.0
    %70 = vmatpush2.msra.mxu0 0.0
    %71 = vmatprep.subr.mxu0 0.0
    %72 = vmatpush2.msra.mxu0 0.0
    %73 = vmatprep.subr.mxu0 0.0
    %74 = vmatpush2.msra.mxu0 0.0
    %75 = vmatprep.subr.mxu0 0.0
    %76 = vmatpush2.msra.mxu0 0.0
    %77 = vmatprep.subr.mxu0 0.0
    %78 = vmatpush2.msra.mxu0 0.0
    %79 = vmatprep.subr.mxu0 0.0
    %80 = vmatpush2.msra.mxu0 0.0
    %81 = vmatprep.subr.mxu0 0.0
    %82 = vmatpush2.msra.mxu0 0.0
    %83 = vmatprep.subr.mxu0 0.0
    %84 = vmatpush2.msra.mxu0 0.0
    %85 = vmatprep.subr.mxu0 0.0
    %86 = vmatpush2.msra.mxu0 0.0
    %87 = vmatprep.subr.mxu0 0.0
    %88 = vmatpush2.msra.mxu0 0.0
    %89 = vmatprep.subr.mxu0 0.0
    %90 = vmatpush2.msra.mxu0 0.0
    %91 = vmatprep.subr.mxu0 0.0
    %92 = vmatpush2.msra.mxu0 0.0
    %93 = vmatprep.subr.mxu0 0.0
    %94 = vmatpush2.msra.mxu0 0.0
    %95 = vmatprep.subr.mxu0 0.0
    %96 = vmatpush2.msra.mxu0 0.0
    %97 = vmatprep.subr.mxu0 0.0
    %98 = vmatpush2.msra.mxu0 0.0
    %99 = vmatprep.subr.mxu0 0.0
    %100 = vmatpush2.msra.mxu0 0.0
    %101 = vmatprep.mubr.f32.mxu0 0.0
    %102 = vmatmul.mubr.f32.gmra.mxu0 %v20
    %v103 = vpop.f32.mrf.mxu0
    %v104 = vadd.f32 0.0, %v103
    %v105 = vpop.f32.mrf.mxu0
    %106 = vdwg.mxu0
    %v107 = vld [vmem:[%s2] sm:$0xff]
    %109 = vset.pattern.permute.xlu0 0
    %110 = vperm.xlu0 %109, %v107
    %v111 = vpop.permute.xlu0 %110
    %v113 = vmul.f32 %v104, %v111
    %v114 = vld [vmem:[%s3] sm:$0x1]
    %v116 = vlaneseq
    %v117 = vshrl.u32 %v116, 7
    %v118 = vsub.s32 0, %v117
    %v119 = vrot.slane %v114, %v118
    %v121 = vmul.f32 %v113, %v119
    %v122 = vsub.f32 %v121, 14.285714
    %v123 = vmul.f32 %v122, 1.442695
    %v124 = vpow.pop %v123
    %p125 = scmp.eq.s32.totalorder 0, 0
    // Predicated region
    $region18: #{tpu_custom_call.1} parent=1 // pred_check
      %p126 = pneg %p125
    $region19: #{tpu_custom_call.1} parent=1 // pred_check_branch
      %128 = sbr.rel (%p126) target = $region21
    $region20: #{tpu_custom_call.1} parent=1 // pred_region
      %vm129 = vcmask 7168
      %130 = vst.msk [vmem:[#allocation2] sm:$0xff] %vm129, 0.0
      %131 = vst.msk [vmem:[#allocation3] sm:$0xff] %vm129, 0.0
    $region21: #{tpu_custom_call.1} parent=1 // pred_fallthru
      _
    %v132 = vld [vmem:[#allocation2] sm:$0xff]
    %vm133 = vcmask 64512
    %v134 = vsel %vm133, %v124, 0.0
    %135 = vadd.xlane.f32.xlu0 %v134
    %v136 = vpop.xlane.xlu0 %135
    %v137 = vadd.f32 %v132, %v136
    %vm138 = vcmask 7168
    %139 = vst.msk [vmem:[#allocation2] sm:$0xff] %vm138, %v137
    %v140 = vrot.slane %v134, 4
    %v141 = vadd.f32 %v134, %v140
    %v142 = vrot.slane %v141, 2
    %v143 = vadd.f32 %v141, %v142
    %v144 = vrot.slane %v143, 1
    %v145 = vadd.f32 %v143, %v144
    %vm146 = vcmask 57344
    %147 = vst.msk [vmem:[#allocation4] sm:$0x1] %vm146, %v145
    %p148 = scmp.eq.s32.totalorder 0, 0
    // Predicated region
    $region22: #{tpu_custom_call.1} parent=1 // pred_check
      %p149 = pneg %p148
    $region23: #{tpu_custom_call.1} parent=1 // pred_check_branch
      %151 = sbr.rel (%p149) target = $region25
    $region24: #{tpu_custom_call.1} parent=1 // pred_region
      %v152 = vlaneseq
      %v153 = vshrl.u32 %v152, 7
      %v154 = vlaneseq
      %v155 = vand.u32 %v154, 127
      %vm156 = vcmp.eq.s32.totalorder %v153, %v155
      %v157 = vsel %vm156, %v121, 0.0
      %v158 = vsel %vm133, %v157, 0.0
      %159 = vadd.xlane.f32.xlu0 %v158
      %v160 = vpop.xlane.xlu0 %159
      %161 = vst.msk [vmem:[#allocation3] sm:$0xff] %vm138, %v160
    $region25: #{tpu_custom_call.1} parent=1 // pred_fallthru
      _
    // Predicated region
    $region26: #{tpu_custom_call.1} parent=1 // pred_check
      %p162 = pneg %p125
    $region27: #{tpu_custom_call.1} parent=1 // pred_check_branch
      %164 = sbr.rel (%p162) target = $region29
    $region28: #{tpu_custom_call.1} parent=1 // pred_region
      %v165 = vld [vmem:[#allocation2] sm:$0xff]
      %v166 = vlog2.pop %v165
      %v167 = vmul.f32 %v166, 0.6931472
      %v168 = vadd.f32 %v167, 14.285714
      %v169 = vld [vmem:[#allocation3] sm:$0xff]
      %v170 = vmul.f32 %v169, 2.0
      %v171 = vsub.f32 %v168, %v170
      %172 = vst.msk [vmem:[%s4] sm:$0xff] %vm138, %v171
    $region29: #{tpu_custom_call.1} parent=1 // pred_fallthru
      _
    // Predicated region
    $region30: #{tpu_custom_call.1} parent=1 // pred_check
      _
    $region31: #{tpu_custom_call.1} parent=1 // pred_check_branch
      %174 = sbr.rel (0) target = $region33
    $region32: #{tpu_custom_call.1} parent=1 // pred_region
      _
    $region33: #{tpu_custom_call.1} parent=1 // pred_fallthru
      _
    // Predicated region
    $region34: #{tpu_custom_call.1} parent=1 // pred_check
      _
    $region35: #{tpu_custom_call.1} parent=1 // pred_check_branch
      %176 = sbr.rel (0) target = $region37
    $region36: #{tpu_custom_call.1} parent=1 // pred_region
      %s178 = ssub.s32 16, 16
      %179 = vsyncadd [#allocation5], %s178
      %s181 = sshll.u32 [#allocation4], 4
      %s182 = int_to_ptr.vmem [resolvable:$true] %s181
      %184 = dma.vmem_to_hbm [thread:$0]  %s182, 16, %s5, [#allocation5]
    $region37: #{tpu_custom_call.1} parent=1 // pred_fallthru
      _
    // Predicated region
    $region38: #{tpu_custom_call.1} parent=1 // pred_check
      _
    $region39: #{tpu_custom_call.1} parent=1 // pred_check_branch
      %186 = sbr.rel (0) target = $region41
    $region40: #{tpu_custom_call.1} parent=1 // pred_region
      _
    $region41: #{tpu_custom_call.1} parent=1 // pred_fallthru
      _
    // Predicated region
    $region42: #{tpu_custom_call.1} parent=1 // pred_check
      _
    $region43: #{tpu_custom_call.1} parent=1 // pred_check_branch
      %188 = sbr.rel (0) target = $region45
    $region44: #{tpu_custom_call.1} parent=1 // pred_region
      %189 = dma.done [#allocation5], 16
    $region45: #{tpu_custom_call.1} parent=1 // pred_fallthru
      _
    %190 = vsyncpa [#allocation5], 1

</llo_original>
